<compile_context>
chip_gen: v7x
topology: tpu7x:2x2x1
jax: 0.10.0
libtpu: 0.0.40
codegen_flags: <defaults>
</compile_context>

<pallas_src>
import functools

import jax
import jax.numpy as jnp
from jax.experimental import pallas as pl
from jax.experimental.pallas import tpu as pltpu


def _attention_cnn_kernel(enc_ref, dec_ref, wf_ref, b_ref, wg_ref, bg_ref, out_ref,
                          *, approx_sigmoid: bool):
    # enc_ref / dec_ref : (G, T)      activations; G = P*C channels on sublanes,
    #                                 T spatial lanes (last tile may be partial).
    # wf_ref            : (P*Ci, 2G)  fused, BN-folded [from_encoding | from_decoding]
    #                                 1x1-conv weight (block-diagonal over P images).
    # b_ref             : (P*Ci, 1)   folded (be + bd) bias.
    # wg_ref            : (G, P*Ci)   folded combine weight, its row replicated over the
    #                                 C channels of each packed image (pre-broadcast gate).
    # bg_ref            : (G, 1)      folded combine bias (replicated).
    # out_ref           : (G, T)      gated decoded features.
    hp = jax.lax.Precision.HIGHEST
    enc = enc_ref[...]
    dec = dec_ref[...]

    # Fused from_encoding + from_decoding 1x1 convs (+BN) as a single MXU matmul, + ReLU.
    x = jnp.concatenate([enc, dec], axis=0)                              # (2G, T)
    h = jnp.dot(wf_ref[...], x,
                preferred_element_type=jnp.float32, precision=hp) + b_ref[...]
    h = jnp.maximum(h, 0.0)                                              # (P*Ci, T)

    # combine 1x1 conv (+BN): emitted directly at (G, T) so the sigmoid gate needs no
    # sublane broadcast; exp + approximate reciprocal run on the (otherwise idle) EUP.
    logit = jnp.dot(wg_ref[...], h,
                    preferred_element_type=jnp.float32, precision=hp) + bg_ref[...]
    if approx_sigmoid:
        att = pl.reciprocal(1.0 + jnp.exp(-logit), approx=True)          # sigmoid, (G, T)
    else:
        att = jax.nn.sigmoid(logit)

    out_ref[...] = (dec * att).astype(out_ref.dtype)


def _round_up(x, m):
    return ((x + m - 1) // m) * m


def _vmem_capacity_bytes():
    try:
        return int(getattr(pltpu.get_tpu_info(), "vmem_capacity_bytes", 64 * 2**20))
    except Exception:
        return 64 * 2**20          # conservative default: v7x has 64 MiB per TensorCore


def _pack_factor(n, c, sublane=8):
    """How many batch images to pack per grid step so P*C fills the 8 f32 sublanes."""
    if c >= sublane:
        return 1
    p = sublane // c
    while p > 1 and n % p:
        p -= 1
    return p


def attention_cnn_pallas(encoded, decoded, params, *,
                         max_tile_s=256 * 1024, approx_sigmoid=True):
    """encoded, decoded: (N, C, H, W) float32.  Returns (N, C, H, W)."""
    N, C, H, W = encoded.shape
    HW = H * W
    we, be, wd, bd, wc, bc = params
    Ci = we.shape[0]

    # ---- batch packing: (N, C, HW) -> (N/P, P*C, HW) is a free reshape ---------------
    P = _pack_factor(N, C)
    G = P * C
    enc3 = encoded.reshape(N // P, G, HW)
    dec3 = decoded.reshape(N // P, G, HW)

    # ---- packed / fused, BN-folded weights (tiny; built once in the wrapper) ---------
    eye_p = jnp.eye(P, dtype=jnp.float32)
    wf = jnp.concatenate([jnp.kron(eye_p, we), jnp.kron(eye_p, wd)], axis=1)  # (P*Ci, 2G)
    b = jnp.tile((be + bd).reshape(Ci, 1), (P, 1))                            # (P*Ci, 1)
    wg = jnp.kron(eye_p, jnp.ones((C, 1), jnp.float32) @ wc.reshape(1, Ci))   # (G, P*Ci)
    bg = jnp.full((G, 1), bc.reshape(()), jnp.float32)                        # (G, 1)

    # ---- spatial tile: lane-dense, sized from a per-generation VMEM budget -----------
    vmem_cap = _vmem_capacity_bytes()
    budget = 48 * 2**20 if vmem_cap >= 100 * 2**20 else 24 * 2**20
    # f32 VMEM bytes per spatial lane: 3 activation arrays x 2 pipeline buffers, the
    # concat temp, ~2 live copies of h, logit/att temps, plus slack.
    per_lane = 4 * (6 * G + 2 * G + 2 * P * Ci + 2 * G + 8)
    cap_lanes = max(128, (budget // per_lane) // 128 * 128)
    max_tile_s = max(128, (max_tile_s // 128) * 128)

    if HW >= 128:
        tile_s = min(_round_up(HW, 128), cap_lanes, max_tile_s)
        # keep >= 2 grid steps so both v7x TensorCores get work ("parallel" axes).
        if N // P == 1 and tile_s >= HW:
            tile_s = _round_up(pl.cdiv(HW, 2), 128)
    else:
        tile_s = HW                     # block == full (tiny) spatial extent

    n_spatial = pl.cdiv(HW, tile_s)
    grid = (N // P, n_spatial)

    need = per_lane * tile_s + (1 << 20)
    vmem_limit = int(min(max(need + 8 * 2**20, 24 * 2**20), (vmem_cap * 7) // 8))

    act_spec = pl.BlockSpec((None, G, tile_s), lambda n, s: (n, 0, s))

    def full_spec(a):
        return pl.BlockSpec(a.shape, lambda n, s: (0,) * a.ndim)

    kernel = functools.partial(_attention_cnn_kernel, approx_sigmoid=approx_sigmoid)

    out3 = pl.pallas_call(
        kernel,
        out_shape=jax.ShapeDtypeStruct((N // P, G, HW), decoded.dtype),
        grid_spec=pltpu.PrefetchScalarGridSpec(
            num_scalar_prefetch=0,
            grid=grid,
            in_specs=[
                act_spec,            # encoded block (G, tile_s)
                act_spec,            # decoded block (G, tile_s)
                full_spec(wf),       # fused conv+BN weight
                full_spec(b),        # fused bias (be + bd)
                full_spec(wg),       # combine weight (gate, rows pre-broadcast)
                full_spec(bg),       # combine bias
            ],
            out_specs=act_spec,
        ),
        compiler_params=pltpu.CompilerParams(
            dimension_semantics=("parallel", "parallel"),
            vmem_limit_bytes=vmem_limit,
        ),
    )(enc3, dec3, wf, b, wg, bg)

    return out3.reshape(N, C, H, W)


def make_params(num_filters_in, num_filters_intern, key):
    """Deterministic parameters; eval-mode BN folded into the 1x1 convs.

    Weights use the conv-native (out_channels, in_channels) layout, which is exactly
    the channel-major layout the kernel consumes.
    """
    C, Ci = num_filters_in, num_filters_intern
    eps = 1e-5
    ks = jax.random.split(key, 6)

    def fold(w, b, gamma, beta, mean, var):
        # BN(conv(x)) = ((w @ x + b) - mean) / sqrt(var+eps) * gamma + beta
        scale = gamma / jnp.sqrt(var + eps)
        return w * scale[:, None], b * scale + (beta - mean * scale)

    # from_encoding: Conv2d(C -> Ci, k=1) + BatchNorm2d(Ci)
    we = jax.random.normal(ks[0], (Ci, C), jnp.float32) * 0.1
    be = jax.random.normal(ks[1], (Ci,), jnp.float32) * 0.1
    ge, bte = jnp.ones((Ci,)) * 1.1, jnp.ones((Ci,)) * 0.05
    me, ve = jnp.zeros((Ci,)) + 0.02, jnp.ones((Ci,)) * 0.9
    we_f, be_f = fold(we, be, ge, bte, me, ve)

    # from_decoding
    wd = jax.random.normal(ks[2], (Ci, C), jnp.float32) * 0.1
    bd = jax.random.normal(ks[3], (Ci,), jnp.float32) * 0.1
    gd, btd = jnp.ones((Ci,)) * 0.9, jnp.zeros((Ci,)) - 0.05
    md, vd = jnp.zeros((Ci,)) - 0.01, jnp.ones((Ci,)) * 1.1
    wd_f, bd_f = fold(wd, bd, gd, btd, md, vd)

    # combine: Conv2d(Ci -> 1, k=1) + BatchNorm2d(1) (+ Sigmoid in the kernel)
    wc = jax.random.normal(ks[4], (1, Ci), jnp.float32) * 0.1
    bc = jax.random.normal(ks[5], (1,), jnp.float32) * 0.1
    gc, btc = jnp.ones((1,)) * 1.05, jnp.zeros((1,)) + 0.1
    mc, vc = jnp.zeros((1,)) + 0.03, jnp.ones((1,)) * 0.95
    wc_f, bc_f = fold(wc, bc, gc, btc, mc, vc)

    return (we_f, be_f, wd_f, bd_f, wc_f, bc_f)


def reference(encoded, decoded, params):
    """Pure-JAX reference of the PyTorch forward (eval-mode BN folded)."""
    we, be, wd, bd, wc, bc = params
    hp = jax.lax.Precision.HIGHEST
    t_e = jnp.einsum('oc,nchw->nohw', we, encoded, precision=hp) + be.reshape(1, -1, 1, 1)
    t_d = jnp.einsum('oc,nchw->nohw', wd, decoded, precision=hp) + bd.reshape(1, -1, 1, 1)
    h = jnp.maximum(t_e + t_d, 0.0)
    logit = jnp.einsum('oc,nchw->nohw', wc, h, precision=hp) + bc.reshape(1, 1, 1, 1)
    att = jax.nn.sigmoid(logit)
    return decoded * att


if __name__ == "__main__":
    num_filters_in = 4      # C
    num_filters_intern = 8  # Ci

    key = jax.random.PRNGKey(0)
    k_par, key = jax.random.split(key)
    params = make_params(num_filters_in, num_filters_intern, k_par)

    # Second case has HW % 128 != 0 so the partial-last-tile path (masked OOB stores,
    # never-read-back garbage input lanes) is exercised.
    for (n, h, w) in [(2, 16, 16), (2, 10, 14)]:
        k_enc, k_dec, key = jax.random.split(key, 3)
        encoded = jax.random.normal(k_enc, (n, num_filters_in, h, w), jnp.float32)
        decoded = jax.random.normal(k_dec, (n, num_filters_in, h, w), jnp.float32)
        ref = reference(encoded, decoded, params)

        # Exact-sigmoid path: pins down the module semantics tightly.
        out_exact = jax.block_until_ready(
            attention_cnn_pallas(encoded, decoded, params, approx_sigmoid=False))
        assert out_exact.shape == encoded.shape
        err_exact = float(jnp.max(jnp.abs(out_exact - ref)))
        assert err_exact < 2e-5, f"exact-sigmoid path error {err_exact}"

        # Default fast path: EUP exp + approximate reciprocal for the sigmoid
        # (approx reciprocal contributes ~1e-4-level relative error on the gate).
        out = jax.block_until_ready(attention_cnn_pallas(encoded, decoded, params))
        err = float(jnp.max(jnp.abs(out - ref)))
        assert err < 1e-2, f"approx-sigmoid path error {err}"

    print("KERNEL_OK")
</pallas_src>

<mosaic_0001>
module attributes {stable_mosaic.version = 11 : i64} {
  func.func @_attention_cnn_kernel(%arg0: i32, %arg1: i32, %arg2: memref<1x8x128xf32, #tpu.memory_space<vmem>>, %arg3: memref<1x8x128xf32, #tpu.memory_space<vmem>>, %arg4: memref<16x16xf32, #tpu.memory_space<vmem>>, %arg5: memref<16x1xf32, #tpu.memory_space<vmem>>, %arg6: memref<8x16xf32, #tpu.memory_space<vmem>>, %arg7: memref<8x1xf32, #tpu.memory_space<vmem>>, %arg8: memref<1x8x128xf32, #tpu.memory_space<vmem>>) attributes {dimension_semantics = [#tpu.dimension_semantics<parallel>, #tpu.dimension_semantics<parallel>], iteration_bounds = array<i64: 1, 2>, scalar_prefetch = 0 : i64, scratch_operands = 0 : i64, tpu.core_type = #tpu.core_type<tc>, window_params = [{transform_indices = @transform_0, window_bounds = array<i64: 1, 8, 128>}, {transform_indices = @transform_1, window_bounds = array<i64: 1, 8, 128>}, {pipeline_mode = #tpu.pipeline_mode<synchronous>, transform_indices = @transform_2, window_bounds = array<i64: 16, 16>}, {pipeline_mode = #tpu.pipeline_mode<synchronous>, transform_indices = @transform_3, window_bounds = array<i64: 16, 1>}, {pipeline_mode = #tpu.pipeline_mode<synchronous>, transform_indices = @transform_4, window_bounds = array<i64: 8, 16>}, {pipeline_mode = #tpu.pipeline_mode<synchronous>, transform_indices = @transform_5, window_bounds = array<i64: 8, 1>}, {transform_indices = @transform_6, window_bounds = array<i64: 1, 8, 128>}]} {
    %c0 = arith.constant 0 : index
    %c0_0 = arith.constant 0 : index
    %c0_1 = arith.constant 0 : index
    %0 = vector.load %arg2[%c0, %c0_0, %c0_1] : memref<1x8x128xf32, #tpu.memory_space<vmem>>, vector<1x8x128xf32>
    %1 = vector.shape_cast %0 : vector<1x8x128xf32> to vector<8x128xf32>
    %c0_2 = arith.constant 0 : index
    %c0_3 = arith.constant 0 : index
    %c0_4 = arith.constant 0 : index
    %2 = vector.load %arg3[%c0_2, %c0_3, %c0_4] : memref<1x8x128xf32, #tpu.memory_space<vmem>>, vector<1x8x128xf32>
    %3 = vector.shape_cast %2 : vector<1x8x128xf32> to vector<8x128xf32>
    %4 = tpu.concatenate %1, %3 in 0 : vector<8x128xf32>, vector<8x128xf32> -> vector<16x128xf32>
    %c0_5 = arith.constant 0 : index
    %c0_6 = arith.constant 0 : index
    %5 = vector.load %arg4[%c0_5, %c0_6] : memref<16x16xf32, #tpu.memory_space<vmem>>, vector<16x16xf32>
    %cst = arith.constant dense<0.000000e+00> : vector<16x128xf32>
    %6 = tpu.matmul %5, %4, %cst {dimension_numbers = #tpu.dot_dimension_numbers<[1], [0], [0], [1], [0, 0, 1, 1], [], []>, precision = #tpu.contract_precision<fp32>} : vector<16x16xf32>, vector<16x128xf32>, vector<16x128xf32> -> vector<16x128xf32>
    %c0_7 = arith.constant 0 : index
    %c0_8 = arith.constant 0 : index
    %7 = vector.load %arg5[%c0_7, %c0_8] : memref<16x1xf32, #tpu.memory_space<vmem>>, vector<16x1xf32>
    %8 = vector.broadcast %7 : vector<16x1xf32> to vector<16x128xf32>
    %9 = arith.addf %6, %8 : vector<16x128xf32>
    %cst_9 = arith.constant 0.000000e+00 : f32
    %10 = vector.broadcast %cst_9 : f32 to vector<16x128xf32>
    %11 = arith.maximumf %9, %10 : vector<16x128xf32>
    %c0_10 = arith.constant 0 : index
    %c0_11 = arith.constant 0 : index
    %12 = vector.load %arg6[%c0_10, %c0_11] : memref<8x16xf32, #tpu.memory_space<vmem>>, vector<8x16xf32>
    %cst_12 = arith.constant dense<0.000000e+00> : vector<8x128xf32>
    %13 = tpu.matmul %12, %11, %cst_12 {dimension_numbers = #tpu.dot_dimension_numbers<[1], [0], [0], [1], [0, 0, 1, 1], [], []>, precision = #tpu.contract_precision<fp32>} : vector<8x16xf32>, vector<16x128xf32>, vector<8x128xf32> -> vector<8x128xf32>
    %c0_13 = arith.constant 0 : index
    %c0_14 = arith.constant 0 : index
    %14 = vector.load %arg7[%c0_13, %c0_14] : memref<8x1xf32, #tpu.memory_space<vmem>>, vector<8x1xf32>
    %15 = vector.broadcast %14 : vector<8x1xf32> to vector<8x128xf32>
    %16 = arith.addf %13, %15 : vector<8x128xf32>
    %17 = arith.negf %16 : vector<8x128xf32>
    %18 = math.exp %17 : vector<8x128xf32>
    %cst_15 = arith.constant 1.000000e+00 : f32
    %19 = vector.broadcast %cst_15 : f32 to vector<8x128xf32>
    %20 = arith.addf %19, %18 : vector<8x128xf32>
    %21 = arith.divf %19, %20 : vector<8x128xf32>
    %22 = arith.mulf %3, %21 : vector<8x128xf32>
    %c0_16 = arith.constant 0 : index
    %c0_17 = arith.constant 0 : index
    %c0_18 = arith.constant 0 : index
    %23 = vector.load %arg8[%c0_16, %c0_17, %c0_18] : memref<1x8x128xf32, #tpu.memory_space<vmem>>, vector<1x8x128xf32>
    %24 = vector.shape_cast %23 : vector<1x8x128xf32> to vector<8x128xf32>
    %25 = vector.shape_cast %22 : vector<8x128xf32> to vector<1x8x128xf32>
    tpu.vector_store %arg8[%c0_16, %c0_17, %c0_18], %25 {strides = array<i32>} : memref<1x8x128xf32, #tpu.memory_space<vmem>>, vector<1x8x128xf32>,
    return
  }
  func.func @transform_0(%arg0: i32, %arg1: i32) -> (i32, i32, i32) {
    %c0_i32 = arith.constant 0 : i32
    %c0_i32_0 = arith.constant 0 : i32
    return %arg0, %c0_i32, %arg1 : i32, i32, i32
  }
  func.func @transform_1(%arg0: i32, %arg1: i32) -> (i32, i32, i32) {
    %c0_i32 = arith.constant 0 : i32
    %c0_i32_0 = arith.constant 0 : i32
    return %arg0, %c0_i32, %arg1 : i32, i32, i32
  }
  func.func @transform_2(%arg0: i32, %arg1: i32) -> (i32, i32) {
    %c0_i32 = arith.constant 0 : i32
    %c0_i32_0 = arith.constant 0 : i32
    %c0_i32_1 = arith.constant 0 : i32
    return %c0_i32, %c0_i32_0 : i32, i32
  }
  func.func @transform_3(%arg0: i32, %arg1: i32) -> (i32, i32) {
    %c0_i32 = arith.constant 0 : i32
    %c0_i32_0 = arith.constant 0 : i32
    %c0_i32_1 = arith.constant 0 : i32
    return %c0_i32, %c0_i32_0 : i32, i32
  }
  func.func @transform_4(%arg0: i32, %arg1: i32) -> (i32, i32) {
    %c0_i32 = arith.constant 0 : i32
    %c0_i32_0 = arith.constant 0 : i32
    %c0_i32_1 = arith.constant 0 : i32
    return %c0_i32, %c0_i32_0 : i32, i32
  }
  func.func @transform_5(%arg0: i32, %arg1: i32) -> (i32, i32) {
    %c0_i32 = arith.constant 0 : i32
    %c0_i32_0 = arith.constant 0 : i32
    %c0_i32_1 = arith.constant 0 : i32
    return %c0_i32, %c0_i32_0 : i32, i32
  }
  func.func @transform_6(%arg0: i32, %arg1: i32) -> (i32, i32, i32) {
    %c0_i32 = arith.constant 0 : i32
    %c0_i32_0 = arith.constant 0 : i32
    return %arg0, %c0_i32, %arg1 : i32, i32, i32
  }
}

</mosaic_0001>

<llo_original>
// kernel: tpu_custom_call.1
$region0: #{tpu_custom_call.1}
  #allocation0 [shape = 'u32[]', space=smem, size = 0x4, offset = 0x4, fixed_abs, tag = 'smem constant byte address 0x4 - core index']
  #allocation1 [shape = 'u32[144,128]{1,0:T(1,128)}', space=vmem, size = 0x12000, scoped, tag = 'internal scratch']
  %s0 = inlined_call_operand.vmem [shape: f32[1,8,256], index: 0, kind: input, shape index: {}]
  %s1 = inlined_call_operand.hbm [shape: f32[1,8,256], index: 1, kind: input, shape index: {}]
  %s2 = inlined_call_operand.vmem [shape: f32[16,16], index: 2, kind: input, shape index: {}]
  %s3 = inlined_call_operand.vmem [shape: f32[16,1], index: 3, kind: input, shape index: {}]
  %s4 = inlined_call_operand.vmem [shape: f32[8,16], index: 4, kind: input, shape index: {}]
  %s5 = inlined_call_operand.vmem [shape: f32[8,1], index: 5, kind: input, shape index: {}]
  %s6 = inlined_call_operand.hbm [shape: f32[1,8,256], index: 6, kind: output, shape index: {}]
  %s7 = sld [smem:[#allocation0]]
  $region61: #{tpu_custom_call.1} parent=0
    _
  %s9 = ssub.s32 1, %s7
  %s10 = scalar_select 0, %s9, %s7
  $region1: #{tpu_custom_call.1} parent=0
    #allocation2 [shape = 'u8[8192]{0}', space=vmem, size = 0x2000, scoped, tag = 'input window, operand 1']
    #allocation3 [shape = 's32[2]{0}', space=sflag, size = 0x8, scoped, tag = 'scoped memory for tpu_custom_call.1']
    #allocation4 [shape = 's32[2]{0}', space=sflag, size = 0x8, scoped, tag = 'scoped memory for tpu_custom_call.1']
    #allocation5 [shape = 'u8[8192]{0}', space=vmem, size = 0x2000, scoped, tag = 'output window, operand 0']
    %11 = vsyncpa [#allocation3], 0
    %s12 = scalar_lea.sflag [#allocation3], 1
    %13 = vsyncpa %s12, 0
    %14 = vsyncpa [#allocation4], 0
    %s15 = scalar_lea.sflag [#allocation4], 1
    %16 = vsyncpa %s15, 0
    loop: start=0, step=1, limit=4
    $region2: #{tpu_custom_call.1} parent=1 // loop_pre_header
      _
    $region3: #{tpu_custom_call.1} parent=1 // loop_header
      %s18 = sphi 0, %s22
      %p19 = scmp.ge.s32.totalorder %s18, 4
      %s25 = sphi 0, %s37
      %s26 = sphi 0, %s33
      %s27 = sphi 0, %s25
      %s28 = sphi 0, %s26
      %s29 = sphi 0, %s27
      %s30 = sphi 0, %s28
      %s42 = sphi 0, %s44
      %s45 = sphi 0, %s42
      %s46 = sphi 0, %s45
      %s62 = sphi 0, %s46
      %s70 = sphi 0, %s72
      %s73 = sphi 0, %s70
      %s74 = sphi 0, %s73
      %s90 = sphi 0, %s74
      %s94 = sphi 0, %s94
      %s96 = sphi 0, %s94
      %s97 = sphi 0, %s96
      %s111 = sphi 0, %s97
      %s115 = sphi 0, %s115
      %s117 = sphi 0, %s115
      %s118 = sphi 0, %s117
      %s132 = sphi 0, %s118
      %s136 = sphi 0, %s136
      %s138 = sphi 0, %s136
      %s139 = sphi 0, %s138
      %s153 = sphi 0, %s139
      %s157 = sphi 0, %s157
      %s159 = sphi 0, %s157
      %s160 = sphi 0, %s159
      %s174 = sphi 0, %s160
      %s182 = sphi 0, %s184
      %s185 = sphi 0, %s182
      %s186 = sphi 0, %s185
      %s202 = sphi 0, %s186
    $region4: #{tpu_custom_call.1} parent=1 // loop_header_branch
      %21 = sbr.rel (%p19) target = $region8
    $region5: #{tpu_custom_call.1} parent=1 // loop_body
      %s23 = ssub.s32 %s18, 1
      %s24 = ssub.s32 %s18, 2
      %s31 = sadd.s32 1, %s26
      %p32 = scmp.ge.s32.totalorder %s31, 2
      %s33 = scalar_select %p32, 0, %s31
      %s34 = sadd.s32 1, %s25
      %s35 = scalar_select %p32, %s34, %s25
      %p36 = scmp.ge.s32.totalorder %s35, 1
      %s37 = scalar_select %p36, 0, %s35
      %s38 = ssub.s32 %s25, %s37
      %s39 = ssub.s32 %s26, %s33
      %s40 = sor.u32 %s38, %s39
      %p41 = scmp.eq.s32.totalorder %s40, 0
      %s43 = sadd.s32 %s42, 1
      %s44 = scalar_select %p41, %s42, %s43
      %p47 = pneg %p41
      %p48 = scmp.eq.s32.totalorder %s18, 1
      %p49 = por %p47, %p48
      %p50 = scmp.ne.s32.totalorder %s42, %s45
      %p51 = scmp.eq.s32.totalorder %s18, 0
      %p52 = por %p50, %p51
      %p53 = scmp.ne.s32.totalorder %s42, %s45
      %p54 = scmp.eq.s32.totalorder %s23, 1
      %p55 = por %p53, %p54
      %p56 = scmp.ne.s32.totalorder %s45, %s46
      %p57 = scmp.eq.s32.totalorder %s23, 0
      %p58 = por %p56, %p57
      %p59 = scmp.ne.s32.totalorder %s45, %s46
      %p60 = scmp.eq.s32.totalorder %s24, 1
      %p61 = por %p59, %p60
      %p63 = scmp.ne.s32.totalorder %s46, %s62
      %p64 = scmp.eq.s32.totalorder %s24, 0
      %p65 = por %p63, %p64
      %s66 = ssub.s32 %s25, %s37
      %s67 = ssub.s32 %s26, %s33
      %s68 = sor.u32 %s66, %s67
      %p69 = scmp.eq.s32.totalorder %s68, 0
      %s71 = sadd.s32 %s70, 1
      %s72 = scalar_select %p69, %s70, %s71
      %p75 = pneg %p69
      %p76 = scmp.eq.s32.totalorder %s18, 1
      %p77 = por %p75, %p76
      %p78 = scmp.ne.s32.totalorder %s70, %s73
      %p79 = scmp.eq.s32.totalorder %s18, 0
      %p80 = por %p78, %p79
      %p81 = scmp.ne.s32.totalorder %s70, %s73
      %p82 = scmp.eq.s32.totalorder %s23, 1
      %p83 = por %p81, %p82
      %p84 = scmp.ne.s32.totalorder %s73, %s74
      %p85 = scmp.eq.s32.totalorder %s23, 0
      %p86 = por %p84, %p85
      %p87 = scmp.ne.s32.totalorder %s73, %s74
      %p88 = scmp.eq.s32.totalorder %s24, 1
      %p89 = por %p87, %p88
      %p91 = scmp.ne.s32.totalorder %s74, %s90
      %p92 = scmp.eq.s32.totalorder %s24, 0
      %p93 = por %p91, %p92
      %s95 = sadd.s32 %s94, 1
      %p98 = scmp.eq.s32.totalorder %s18, 1
      %p99 = scmp.ne.s32.totalorder %s94, %s96
      %p100 = scmp.eq.s32.totalorder %s18, 0
      %p101 = por %p99, %p100
      %p102 = scmp.ne.s32.totalorder %s94, %s96
      %p103 = scmp.eq.s32.totalorder %s23, 1
      %p104 = por %p102, %p103
      %p105 = scmp.ne.s32.totalorder %s96, %s97
      %p106 = scmp.eq.s32.totalorder %s23, 0
      %p107 = por %p105, %p106
      %p108 = scmp.ne.s32.totalorder %s96, %s97
      %p109 = scmp.eq.s32.totalorder %s24, 1
      %p110 = por %p108, %p109
      %p112 = scmp.ne.s32.totalorder %s97, %s111
      %p113 = scmp.eq.s32.totalorder %s24, 0
      %p114 = por %p112, %p113
      %s116 = sadd.s32 %s115, 1
      %p119 = scmp.eq.s32.totalorder %s18, 1
      %p120 = scmp.ne.s32.totalorder %s115, %s117
      %p121 = scmp.eq.s32.totalorder %s18, 0
      %p122 = por %p120, %p121
      %p123 = scmp.ne.s32.totalorder %s115, %s117
      %p124 = scmp.eq.s32.totalorder %s23, 1
      %p125 = por %p123, %p124
      %p126 = scmp.ne.s32.totalorder %s117, %s118
      %p127 = scmp.eq.s32.totalorder %s23, 0
      %p128 = por %p126, %p127
      %p129 = scmp.ne.s32.totalorder %s117, %s118
      %p130 = scmp.eq.s32.totalorder %s24, 1
      %p131 = por %p129, %p130
      %p133 = scmp.ne.s32.totalorder %s118, %s132
      %p134 = scmp.eq.s32.totalorder %s24, 0
      %p135 = por %p133, %p134
      %s137 = sadd.s32 %s136, 1
      %p140 = scmp.eq.s32.totalorder %s18, 1
      %p141 = scmp.ne.s32.totalorder %s136, %s138
      %p142 = scmp.eq.s32.totalorder %s18, 0
      %p143 = por %p141, %p142
      %p144 = scmp.ne.s32.totalorder %s136, %s138
      %p145 = scmp.eq.s32.totalorder %s23, 1
      %p146 = por %p144, %p145
      %p147 = scmp.ne.s32.totalorder %s138, %s139
      %p148 = scmp.eq.s32.totalorder %s23, 0
      %p149 = por %p147, %p148
      %p150 = scmp.ne.s32.totalorder %s138, %s139
      %p151 = scmp.eq.s32.totalorder %s24, 1
      %p152 = por %p150, %p151
      %p154 = scmp.ne.s32.totalorder %s139, %s153
      %p155 = scmp.eq.s32.totalorder %s24, 0
      %p156 = por %p154, %p155
      %s158 = sadd.s32 %s157, 1
      %p161 = scmp.eq.s32.totalorder %s18, 1
      %p162 = scmp.ne.s32.totalorder %s157, %s159
      %p163 = scmp.eq.s32.totalorder %s18, 0
      %p164 = por %p162, %p163
      %p165 = scmp.ne.s32.totalorder %s157, %s159
      %p166 = scmp.eq.s32.totalorder %s23, 1
      %p167 = por %p165, %p166
      %p168 = scmp.ne.s32.totalorder %s159, %s160
      %p169 = scmp.eq.s32.totalorder %s23, 0
      %p170 = por %p168, %p169
      %p171 = scmp.ne.s32.totalorder %s159, %s160
      %p172 = scmp.eq.s32.totalorder %s24, 1
      %p173 = por %p171, %p172
      %p175 = scmp.ne.s32.totalorder %s160, %s174
      %p176 = scmp.eq.s32.totalorder %s24, 0
      %p177 = por %p175, %p176
      %s178 = ssub.s32 %s25, %s37
      %s179 = ssub.s32 %s26, %s33
      %s180 = sor.u32 %s178, %s179
      %p181 = scmp.eq.s32.totalorder %s180, 0
      %s183 = sadd.s32 %s182, 1
      %s184 = scalar_select %p181, %s182, %s183
      %p187 = pneg %p181
      %p188 = scmp.eq.s32.totalorder %s18, 1
      %p189 = por %p187, %p188
      %p190 = scmp.ne.s32.totalorder %s182, %s185
      %p191 = scmp.eq.s32.totalorder %s18, 0
      %p192 = por %p190, %p191
      %p193 = scmp.ne.s32.totalorder %s182, %s185
      %p194 = scmp.eq.s32.totalorder %s23, 1
      %p195 = por %p193, %p194
      %p196 = scmp.ne.s32.totalorder %s185, %s186
      %p197 = scmp.eq.s32.totalorder %s23, 0
      %p198 = por %p196, %p197
      %p199 = scmp.ne.s32.totalorder %s185, %s186
      %p200 = scmp.eq.s32.totalorder %s24, 1
      %p201 = por %p199, %p200
      %p203 = scmp.ne.s32.totalorder %s186, %s202
      %p204 = scmp.eq.s32.totalorder %s24, 0
      %p205 = por %p203, %p204
      %p206 = scmp.le.s32.totalorder 1, %s18
      %p207 = scmp.lt.s32.totalorder %s18, 3
      %p208 = pnand %p206, %p207
      %p209 = pneg %p208
      // Predicated region
      $region9: #{tpu_custom_call.1} parent=5 // pred_check
        _
      $region10: #{tpu_custom_call.1} parent=5 // pred_check_branch
        %211 = sbr.rel (%p208) target = $region12
      $region11: #{tpu_custom_call.1} parent=5 // pred_region
        %s212 = ssub.s32 %s18, 1
        // Predicated region
        $region13: #{tpu_custom_call.1} parent=11 // pred_check
          %p213 = pneg %p107
        $region14: #{tpu_custom_call.1} parent=11 // pred_check_branch
          %215 = sbr.rel (%p213) target = $region16
        $region15: #{tpu_custom_call.1} parent=11 // pred_region
          _
        $region16: #{tpu_custom_call.1} parent=11 // pred_fallthru
          _
        // Predicated region
        $region17: #{tpu_custom_call.1} parent=11 // pred_check
          %p216 = pneg %p128
        $region18: #{tpu_custom_call.1} parent=11 // pred_check_branch
          %218 = sbr.rel (%p216) target = $region20
        $region19: #{tpu_custom_call.1} parent=11 // pred_region
          _
        $region20: #{tpu_custom_call.1} parent=11 // pred_fallthru
          _
        // Predicated region
        $region21: #{tpu_custom_call.1} parent=11 // pred_check
          %p219 = pneg %p149
        $region22: #{tpu_custom_call.1} parent=11 // pred_check_branch
          %221 = sbr.rel (%p219) target = $region24
        $region23: #{tpu_custom_call.1} parent=11 // pred_region
          _
        $region24: #{tpu_custom_call.1} parent=11 // pred_fallthru
          _
        // Predicated region
        $region25: #{tpu_custom_call.1} parent=11 // pred_check
          %p222 = pneg %p170
        $region26: #{tpu_custom_call.1} parent=11 // pred_check_branch
          %224 = sbr.rel (%p222) target = $region28
        $region27: #{tpu_custom_call.1} parent=11 // pred_region
          _
        $region28: #{tpu_custom_call.1} parent=11 // pred_fallthru
          _
      $region12: #{tpu_custom_call.1} parent=5 // pred_fallthru
        _
      %p225 = scmp.lt.s32.totalorder %s18, 2
      // Predicated region
      $region29: #{tpu_custom_call.1} parent=5 // pred_check
        %p226 = pneg %p225
      $region30: #{tpu_custom_call.1} parent=5 // pred_check_branch
        %228 = sbr.rel (%p226) target = $region32
      $region31: #{tpu_custom_call.1} parent=5 // pred_region
        // Predicated region
        $region33: #{tpu_custom_call.1} parent=31 // pred_check
          %p229 = pneg %p52
        $region34: #{tpu_custom_call.1} parent=31 // pred_check_branch
          %231 = sbr.rel (%p229) target = $region36
        $region35: #{tpu_custom_call.1} parent=31 // pred_region
          %p232 = scmp.lt.s32.totalorder %s25, 0
          %s233 = scalar_select %p232, %s25, 0
          %p234 = scmp.lt.s32.totalorder %s26, 1
          %s235 = scalar_select %p234, %s26, 1
          %s236 = smul.addr %s233, 2
          %s237 = sadd.s32 %s235, %s236
          %s238 = smul.addr %s237, 8
          %s239 = scalar_lea.vmem %s0, %s238
        $region36: #{tpu_custom_call.1} parent=31 // pred_fallthru
          _
        // Predicated region
        $region37: #{tpu_custom_call.1} parent=31 // pred_check
          %p240 = pneg %p80
        $region38: #{tpu_custom_call.1} parent=31 // pred_check_branch
          %242 = sbr.rel (%p240) target = $region40
        $region39: #{tpu_custom_call.1} parent=31 // pred_region
          %s243 = sand.u32 %s70, 1
          %s244 = scalar_lea.sflag [#allocation3], %s243
          %s245 = sand.u32 %s70, 1
          %s246 = smul.addr %s245, 8
          %s247 = scalar_lea.vmem [#allocation2], %s246
          %s249 = ssub.s32 128, 128
          %250 = vsyncadd %s244, %s249
          %s251 = smul.addr %s25, 2
          %s252 = sadd.s32 %s26, %s251
          %s253 = smul.addr %s252, 128
          %s254 = scalar_lea.hbm %s1, %s253
          %s256 = sshll.u32 %s247, 4
          %s257 = int_to_ptr.vmem [resolvable:$true] %s256
          %259 = dma.hbm_to_vmem [thread:$0]  %s254, 128, %s257, %s244
        $region40: #{tpu_custom_call.1} parent=31 // pred_fallthru
          _
      $region32: #{tpu_custom_call.1} parent=5 // pred_fallthru
        _
      %p260 = scmp.le.s32.totalorder 1, %s18
      %p261 = scmp.lt.s32.totalorder %s18, 3
      %p262 = pnand %p260, %p261
      %p263 = pneg %p262
      // Predicated region
      $region41: #{tpu_custom_call.1} parent=5 // pred_check
        _
      $region42: #{tpu_custom_call.1} parent=5 // pred_check_branch
        %265 = sbr.rel (%p262) target = $region44
      $region43: #{tpu_custom_call.1} parent=5 // pred_region
        %s266 = ssub.s32 %s18, 1
        %s267 = sand.u32 %s73, 1
        %s268 = scalar_lea.sflag [#allocation3], %s267
        %s269 = sand.u32 %s73, 1
        %s270 = smul.addr %s269, 8
        %s271 = scalar_lea.vmem [#allocation2], %s270
        // Predicated region
        $region45: #{tpu_custom_call.1} parent=43 // pred_check
          %p272 = pneg %p86
        $region46: #{tpu_custom_call.1} parent=43 // pred_check_branch
          %274 = sbr.rel (%p272) target = $region48
        $region47: #{tpu_custom_call.1} parent=43 // pred_region
          %275 = dma.done %s268, 128
        $region48: #{tpu_custom_call.1} parent=43 // pred_fallthru
          _
        %p276 = scmp.lt.s32.totalorder %s27, 0
        %s277 = scalar_select %p276, %s27, 0
        %p278 = scmp.lt.s32.totalorder %s28, 1
        %s279 = scalar_select %p278, %s28, 1
        %s280 = smul.addr %s277, 2
        %s281 = sadd.s32 %s279, %s280
        %s282 = smul.addr %s281, 8
        %s283 = scalar_lea.vmem %s0, %s282
        %p284 = pneg %p58
        %p285 = pneg %p55
        %s286 = sand.u32 %s73, 1
        %s287 = scalar_lea.sflag [#allocation3], %s286
        %s288 = sand.u32 %s73, 1
        %s289 = smul.addr %s288, 8
        %s290 = scalar_lea.vmem [#allocation2], %s289
        %p291 = pneg %p86
        %p292 = pneg %p83
        %p293 = pneg %p107
        %p294 = pneg %p104
        %p295 = pneg %p128
        %p296 = pneg %p125
        %p297 = pneg %p149
        %p298 = pneg %p146
        %p299 = pneg %p170
        %p300 = pneg %p167
        %p301 = pneg %p198
        %p302 = pneg %p195
        %s303 = sand.u32 %s185, 1
        %s304 = scalar_lea.sflag [#allocation4], %s303
        %s305 = sand.u32 %s185, 1
        %s306 = smul.addr %s305, 8
        %s307 = scalar_lea.vmem [#allocation5], %s306
        %p308 = scmp.lt.s32.totalorder %s27, 0
        %s309 = scalar_select %p308, %s27, 0
        %p310 = scmp.lt.s32.totalorder %s28, 1
        %s311 = scalar_select %p310, %s28, 1
        %s312 = smul.addr %s309, 2
        %s313 = sadd.s32 %s311, %s312
        %s314 = smul.addr %s313, 8
        %s315 = scalar_lea.vmem %s0, %s314
        %v316 = vld [vmem:[%s315] sm:$0xff]
        %v317 = vld [vmem:[%s271] sm:$0xff]
        %v318 = vld [vmem:[%s2] sm:$0xff]
        %v319 = vld [vmem:[%s2 + $0x8] sm:$0xff]
        %v320 = vld [vmem:[%s3] sm:$0xff]
        %v321 = vld [vmem:[%s3 + $0x8] sm:$0xff]
        %323 = vset.pattern.permute.xlu0 0
        %324 = vperm.xlu0 %323, %v320
        %v325 = vpop.permute.xlu0 %324
        %328 = vset.pattern.permute.xlu0 0
        %329 = vperm.xlu0 %328, %v321
        %v330 = vpop.permute.xlu0 %329
        %vm332 = vcmask 130048
        %v334 = vsel %vm332, %v318, 0
        %v337 = vsel %vm332, %v319, 0
        %339 = vmatprep.subr.mxu0 0.0
        %v340 = vand.u32 %v316, 4294901760
        %341 = vmatpush1.msra.mxu0 %v340
        %342 = vmatprep.subr.mxu0 0.0
        %v343 = vand.u32 %v317, 4294901760
        %344 = vmatpush1.msra.mxu0 %v343
        %345 = vmatprep.subr.mxu0 0.0
        %346 = vmatpush1.msra.mxu0 0.0
        %347 = vmatprep.subr.mxu0 0.0
        %348 = vmatpush1.msra.mxu0 0.0
        %349 = vmatprep.subr.mxu0 0.0
        %350 = vmatpush1.msra.mxu0 0.0
        %351 = vmatprep.subr.mxu0 0.0
        %352 = vmatpush1.msra.mxu0 0.0
        %353 = vmatprep.subr.mxu0 0.0
        %354 = vmatpush1.msra.mxu0 0.0
        %355 = vmatprep.subr.mxu0 0.0
        %356 = vmatpush1.msra.mxu0 0.0
        %357 = vmatprep.subr.mxu0 0.0
        %358 = vmatpush1.msra.mxu0 0.0
        %359 = vmatprep.subr.mxu0 0.0
        %360 = vmatpush1.msra.mxu0 0.0
        %361 = vmatprep.subr.mxu0 0.0
        %362 = vmatpush1.msra.mxu0 0.0
        %363 = vmatprep.subr.mxu0 0.0
        %364 = vmatpush1.msra.mxu0 0.0
        %365 = vmatprep.subr.mxu0 0.0
        %366 = vmatpush1.msra.mxu0 0.0
        %367 = vmatprep.subr.mxu0 0.0
        %368 = vmatpush1.msra.mxu0 0.0
        %369 = vmatprep.subr.mxu0 0.0
        %370 = vmatpush1.msra.mxu0 0.0
        %371 = vmatprep.subr.mxu0 0.0
        %372 = vmatpush1.msra.mxu0 0.0
        %373 = vmatprep.subr.mxu0 0.0
        %374 = vmatpush1.msra.mxu0 0.0
        %375 = vmatprep.subr.mxu0 0.0
        %376 = vmatpush1.msra.mxu0 0.0
        %377 = vmatprep.subr.mxu0 0.0
        %378 = vmatpush1.msra.mxu0 0.0
        %379 = vmatprep.subr.mxu0 0.0
        %380 = vmatpush1.msra.mxu0 0.0
        %381 = vmatprep.subr.mxu0 0.0
        %382 = vmatpush1.msra.mxu0 0.0
        %383 = vmatprep.subr.mxu0 0.0
        %384 = vmatpush1.msra.mxu0 0.0
        %385 = vmatprep.subr.mxu0 0.0
        %386 = vmatpush1.msra.mxu0 0.0
        %387 = vmatprep.subr.mxu0 0.0
        %388 = vmatpush1.msra.mxu0 0.0
        %389 = vmatprep.subr.mxu0 0.0
        %390 = vmatpush1.msra.mxu0 0.0
        %391 = vmatprep.subr.mxu0 0.0
        %392 = vmatpush1.msra.mxu0 0.0
        %393 = vmatprep.subr.mxu0 0.0
        %394 = vmatpush1.msra.mxu0 0.0
        %395 = vmatprep.subr.mxu0 0.0
        %396 = vmatpush1.msra.mxu0 0.0
        %397 = vmatprep.subr.mxu0 0.0
        %398 = vmatpush1.msra.mxu0 0.0
        %399 = vmatprep.subr.mxu0 0.0
        %400 = vmatpush1.msra.mxu0 0.0
        %401 = vmatprep.subr.mxu0 0.0
        %402 = vmatpush1.msra.mxu0 0.0
        %403 = vmatprep.subr.mxu0 0.0
        %404 = vmatpush1.msra.mxu0 0.0
        %405 = vmatprep.mubr.f32.mxu0 0.0
        %v406 = vand.u32 %v334, 4294901760
        %v407 = vsub.f32 %v334, %v406
        %v408 = vand.u32 %v407, 4294901760
        %v409 = vsub.f32 %v407, %v408
        %v410 = vand.u32 %v409, 4294901760
        %411 = vmatmul.mubr.f32.gmra.mrb[0].mxu0 %v410
        %v412 = vpop.f32.mrb[0].mxu0
        %v413 = vadd.f32 %v325, %v412
        %v414 = vpop.f32.mrb[0].mxu0
        %415 = vmatprep.mubr.f32.mxu0 0.0
        %v416 = vand.u32 %v337, 4294901760
        %v417 = vsub.f32 %v337, %v416
        %v418 = vand.u32 %v417, 4294901760
        %v419 = vsub.f32 %v417, %v418
        %v420 = vand.u32 %v419, 4294901760
        %421 = vmatmul.mubr.f32.gmra.mrb[0].mxu0 %v420
        %v422 = vpop.f32.mrb[0].mxu0
        %v423 = vadd.f32 %v330, %v422
        %v424 = vpop.f32.mrb[0].mxu0
        %425 = vdwg.mxu0
        %426 = vmatprep.subr.mxu0 0.0
        %v427 = vand.u32 %v316, 4294901760
        %v428 = vsub.f32 %v316, %v427
        %v429 = vand.u32 %v428, 4294901760
        %v430 = vsub.f32 %v428, %v429
        %v431 = vand.u32 %v430, 4294901760
        %432 = vmatpush1.msra.mxu0 %v431
        %433 = vmatprep.subr.mxu0 0.0
        %v434 = vand.u32 %v317, 4294901760
        %v435 = vsub.f32 %v317, %v434
        %v436 = vand.u32 %v435, 4294901760
        %v437 = vsub.f32 %v435, %v436
        %v438 = vand.u32 %v437, 4294901760
        %439 = vmatpush1.msra.mxu0 %v438
        %440 = vmatprep.subr.mxu0 0.0
        %441 = vmatpush1.msra.mxu0 0.0
        %442 = vmatprep.subr.mxu0 0.0
        %443 = vmatpush1.msra.mxu0 0.0
        %444 = vmatprep.subr.mxu0 0.0
        %445 = vmatpush1.msra.mxu0 0.0
        %446 = vmatprep.subr.mxu0 0.0
        %447 = vmatpush1.msra.mxu0 0.0
        %448 = vmatprep.subr.mxu0 0.0
        %449 = vmatpush1.msra.mxu0 0.0
        %450 = vmatprep.subr.mxu0 0.0
        %451 = vmatpush1.msra.mxu0 0.0
        %452 = vmatprep.subr.mxu0 0.0
        %453 = vmatpush1.msra.mxu0 0.0
        %454 = vmatprep.subr.mxu0 0.0
        %455 = vmatpush1.msra.mxu0 0.0
        %456 = vmatprep.subr.mxu0 0.0
        %457 = vmatpush1.msra.mxu0 0.0
        %458 = vmatprep.subr.mxu0 0.0
        %459 = vmatpush1.msra.mxu0 0.0
        %460 = vmatprep.subr.mxu0 0.0
        %461 = vmatpush1.msra.mxu0 0.0
        %462 = vmatprep.subr.mxu0 0.0
        %463 = vmatpush1.msra.mxu0 0.0
        %464 = vmatprep.subr.mxu0 0.0
        %465 = vmatpush1.msra.mxu0 0.0
        %466 = vmatprep.subr.mxu0 0.0
        %467 = vmatpush1.msra.mxu0 0.0
        %468 = vmatprep.subr.mxu0 0.0
        %469 = vmatpush1.msra.mxu0 0.0
        %470 = vmatprep.subr.mxu0 0.0
        %471 = vmatpush1.msra.mxu0 0.0
        %472 = vmatprep.subr.mxu0 0.0
        %473 = vmatpush1.msra.mxu0 0.0
        %474 = vmatprep.subr.mxu0 0.0
        %475 = vmatpush1.msra.mxu0 0.0
        %476 = vmatprep.subr.mxu0 0.0
        %477 = vmatpush1.msra.mxu0 0.0
        %478 = vmatprep.subr.mxu0 0.0
        %479 = vmatpush1.msra.mxu0 0.0
        %480 = vmatprep.subr.mxu0 0.0
        %481 = vmatpush1.msra.mxu0 0.0
        %482 = vmatprep.subr.mxu0 0.0
        %483 = vmatpush1.msra.mxu0 0.0
        %484 = vmatprep.subr.mxu0 0.0
        %485 = vmatpush1.msra.mxu0 0.0
        %486 = vmatprep.subr.mxu0 0.0
        %487 = vmatpush1.msra.mxu0 0.0
        %488 = vmatprep.subr.mxu0 0.0
        %489 = vmatpush1.msra.mxu0 0.0
        %490 = vmatprep.subr.mxu0 0.0
        %491 = vmatpush1.msra.mxu0 0.0
        %492 = vmatprep.subr.mxu0 0.0
        %493 = vmatpush1.msra.mxu0 0.0
        %494 = vmatprep.subr.mxu0 0.0
        %495 = vmatpush1.msra.mxu0 0.0
        %496 = vmatprep.subr.mxu0 0.0
        %497 = vmatpush1.msra.mxu0 0.0
        %498 = vmatprep.subr.mxu0 0.0
        %499 = vmatpush1.msra.mxu0 0.0
        %500 = vmatprep.mubr.f32.mxu0 0.0
        %v501 = vand.u32 %v334, 4294901760
        %502 = vmatmul.mubr.f32.gmra.mrb[0].mxu0 %v501
        %v503 = vpop.f32.mrb[0].mxu0
        %v504 = vadd.f32 %v413, %v503
        %v505 = vpop.f32.mrb[0].mxu0
        %506 = vmatprep.mubr.f32.mxu0 0.0
        %v507 = vand.u32 %v337, 4294901760
        %508 = vmatmul.mubr.f32.gmra.mrb[0].mxu0 %v507
        %v509 = vpop.f32.mrb[0].mxu0
        %v510 = vadd.f32 %v423, %v509
        %v511 = vpop.f32.mrb[0].mxu0
        %512 = vdwg.mxu0
        %513 = vmatprep.subr.mxu0 0.0
        %v514 = vand.u32 %v316, 4294901760
        %v515 = vsub.f32 %v316, %v514
        %516 = vmatpush1.msra.mxu0 %v515
        %517 = vmatprep.subr.mxu0 0.0
        %v518 = vand.u32 %v317, 4294901760
        %v519 = vsub.f32 %v317, %v518
        %520 = vmatpush1.msra.mxu0 %v519
        %521 = vmatprep.subr.mxu0 0.0
        %522 = vmatpush1.msra.mxu0 0.0
        %523 = vmatprep.subr.mxu0 0.0
        %524 = vmatpush1.msra.mxu0 0.0
        %525 = vmatprep.subr.mxu0 0.0
        %526 = vmatpush1.msra.mxu0 0.0
        %527 = vmatprep.subr.mxu0 0.0
        %528 = vmatpush1.msra.mxu0 0.0
        %529 = vmatprep.subr.mxu0 0.0
        %530 = vmatpush1.msra.mxu0 0.0
        %531 = vmatprep.subr.mxu0 0.0
        %532 = vmatpush1.msra.mxu0 0.0
        %533 = vmatprep.subr.mxu0 0.0
        %534 = vmatpush1.msra.mxu0 0.0
        %535 = vmatprep.subr.mxu0 0.0
        %536 = vmatpush1.msra.mxu0 0.0
        %537 = vmatprep.subr.mxu0 0.0
        %538 = vmatpush1.msra.mxu0 0.0
        %539 = vmatprep.subr.mxu0 0.0
        %540 = vmatpush1.msra.mxu0 0.0
        %541 = vmatprep.subr.mxu0 0.0
        %542 = vmatpush1.msra.mxu0 0.0
        %543 = vmatprep.subr.mxu0 0.0
        %544 = vmatpush1.msra.mxu0 0.0
        %545 = vmatprep.subr.mxu0 0.0
        %546 = vmatpush1.msra.mxu0 0.0
        %547 = vmatprep.subr.mxu0 0.0
        %548 = vmatpush1.msra.mxu0 0.0
        %549 = vmatprep.subr.mxu0 0.0
        %550 = vmatpush1.msra.mxu0 0.0
        %551 = vmatprep.subr.mxu0 0.0
        %552 = vmatpush1.msra.mxu0 0.0
        %553 = vmatprep.subr.mxu0 0.0
        %554 = vmatpush1.msra.mxu0 0.0
        %555 = vmatprep.subr.mxu0 0.0
        %556 = vmatpush1.msra.mxu0 0.0
        %557 = vmatprep.subr.mxu0 0.0
        %558 = vmatpush1.msra.mxu0 0.0
        %559 = vmatprep.subr.mxu0 0.0
        %560 = vmatpush1.msra.mxu0 0.0
        %561 = vmatprep.subr.mxu0 0.0
        %562 = vmatpush1.msra.mxu0 0.0
        %563 = vmatprep.subr.mxu0 0.0
        %564 = vmatpush1.msra.mxu0 0.0
        %565 = vmatprep.subr.mxu0 0.0
        %566 = vmatpush1.msra.mxu0 0.0
        %567 = vmatprep.subr.mxu0 0.0
        %568 = vmatpush1.msra.mxu0 0.0
        %569 = vmatprep.subr.mxu0 0.0
        %570 = vmatpush1.msra.mxu0 0.0
        %571 = vmatprep.subr.mxu0 0.0
        %572 = vmatpush1.msra.mxu0 0.0
        %573 = vmatprep.subr.mxu0 0.0
        %574 = vmatpush1.msra.mxu0 0.0
        %575 = vmatprep.subr.mxu0 0.0
        %576 = vmatpush1.msra.mxu0 0.0
        %577 = vmatprep.subr.mxu0 0.0
        %578 = vmatpush1.msra.mxu0 0.0
        %579 = vmatprep.subr.mxu0 0.0
        %580 = vmatpush1.msra.mxu0 0.0
        %581 = vmatprep.mubr.f32.mxu0 0.0
        %v582 = vand.u32 %v334, 4294901760
        %v583 = vsub.f32 %v334, %v582
        %584 = vmatmul.mubr.f32.gmra.mrb[0].mxu0 %v583
        %v585 = vpop.f32.mrb[0].mxu0
        %v586 = vadd.f32 %v504, %v585
        %v587 = vpop.f32.mrb[0].mxu0
        %588 = vmatprep.mubr.f32.mxu0 0.0
        %v589 = vand.u32 %v337, 4294901760
        %v590 = vsub.f32 %v337, %v589
        %591 = vmatmul.mubr.f32.gmra.mrb[0].mxu0 %v590
        %v592 = vpop.f32.mrb[0].mxu0
        %v593 = vadd.f32 %v510, %v592
        %v594 = vpop.f32.mrb[0].mxu0
        %595 = vdwg.mxu0
        %596 = vmatprep.subr.mxu0 0.0
        %v597 = vand.u32 %v316, 4294901760
        %598 = vmatpush1.msra.mxu0 %v597
        %599 = vmatprep.subr.mxu0 0.0
        %v600 = vand.u32 %v317, 4294901760
        %601 = vmatpush1.msra.mxu0 %v600
        %602 = vmatprep.subr.mxu0 0.0
        %603 = vmatpush1.msra.mxu0 0.0
        %604 = vmatprep.subr.mxu0 0.0
        %605 = vmatpush1.msra.mxu0 0.0
        %606 = vmatprep.subr.mxu0 0.0
        %607 = vmatpush1.msra.mxu0 0.0
        %608 = vmatprep.subr.mxu0 0.0
        %609 = vmatpush1.msra.mxu0 0.0
        %610 = vmatprep.subr.mxu0 0.0
        %611 = vmatpush1.msra.mxu0 0.0
        %612 = vmatprep.subr.mxu0 0.0
        %613 = vmatpush1.msra.mxu0 0.0
        %614 = vmatprep.subr.mxu0 0.0
        %615 = vmatpush1.msra.mxu0 0.0
        %616 = vmatprep.subr.mxu0 0.0
        %617 = vmatpush1.msra.mxu0 0.0
        %618 = vmatprep.subr.mxu0 0.0
        %619 = vmatpush1.msra.mxu0 0.0
        %620 = vmatprep.subr.mxu0 0.0
        %621 = vmatpush1.msra.mxu0 0.0
        %622 = vmatprep.subr.mxu0 0.0
        %623 = vmatpush1.msra.mxu0 0.0
        %624 = vmatprep.subr.mxu0 0.0
        %625 = vmatpush1.msra.mxu0 0.0
        %626 = vmatprep.subr.mxu0 0.0
        %627 = vmatpush1.msra.mxu0 0.0
        %628 = vmatprep.subr.mxu0 0.0
        %629 = vmatpush1.msra.mxu0 0.0
        %630 = vmatprep.subr.mxu0 0.0
        %631 = vmatpush1.msra.mxu0 0.0
        %632 = vmatprep.subr.mxu0 0.0
        %633 = vmatpush1.msra.mxu0 0.0
        %634 = vmatprep.subr.mxu0 0.0
        %635 = vmatpush1.msra.mxu0 0.0
        %636 = vmatprep.subr.mxu0 0.0
        %637 = vmatpush1.msra.mxu0 0.0
        %638 = vmatprep.subr.mxu0 0.0
        %639 = vmatpush1.msra.mxu0 0.0
        %640 = vmatprep.subr.mxu0 0.0
        %641 = vmatpush1.msra.mxu0 0.0
        %642 = vmatprep.subr.mxu0 0.0
        %643 = vmatpush1.msra.mxu0 0.0
        %644 = vmatprep.subr.mxu0 0.0
        %645 = vmatpush1.msra.mxu0 0.0
        %646 = vmatprep.subr.mxu0 0.0
        %647 = vmatpush1.msra.mxu0 0.0
        %648 = vmatprep.subr.mxu0 0.0
        %649 = vmatpush1.msra.mxu0 0.0
        %650 = vmatprep.subr.mxu0 0.0
        %651 = vmatpush1.msra.mxu0 0.0
        %652 = vmatprep.subr.mxu0 0.0
        %653 = vmatpush1.msra.mxu0 0.0
        %654 = vmatprep.subr.mxu0 0.0
        %655 = vmatpush1.msra.mxu0 0.0
        %656 = vmatprep.subr.mxu0 0.0
        %657 = vmatpush1.msra.mxu0 0.0
        %658 = vmatprep.subr.mxu0 0.0
        %659 = vmatpush1.msra.mxu0 0.0
        %660 = vmatprep.subr.mxu0 0.0
        %661 = vmatpush1.msra.mxu0 0.0
        %662 = vmatprep.mubr.f32.mxu0 0.0
        %v663 = vand.u32 %v334, 4294901760
        %v664 = vsub.f32 %v334, %v663
        %v665 = vand.u32 %v664, 4294901760
        %666 = vmatmul.mubr.f32.gmra.mrb[0].mxu0 %v665
        %v667 = vpop.f32.mrb[0].mxu0
        %v668 = vadd.f32 %v586, %v667
        %v669 = vpop.f32.mrb[0].mxu0
        %670 = vmatprep.mubr.f32.mxu0 0.0
        %v671 = vand.u32 %v337, 4294901760
        %v672 = vsub.f32 %v337, %v671
        %v673 = vand.u32 %v672, 4294901760
        %674 = vmatmul.mubr.f32.gmra.mrb[0].mxu0 %v673
        %v675 = vpop.f32.mrb[0].mxu0
        %v676 = vadd.f32 %v593, %v675
        %v677 = vpop.f32.mrb[0].mxu0
        %678 = vdwg.mxu0
        %679 = vmatprep.subr.mxu0 0.0
        %v680 = vand.u32 %v316, 4294901760
        %v681 = vsub.f32 %v316, %v680
        %v682 = vand.u32 %v681, 4294901760
        %683 = vmatpush1.msra.mxu0 %v682
        %684 = vmatprep.subr.mxu0 0.0
        %v685 = vand.u32 %v317, 4294901760
        %v686 = vsub.f32 %v317, %v685
        %v687 = vand.u32 %v686, 4294901760
        %688 = vmatpush1.msra.mxu0 %v687
        %689 = vmatprep.subr.mxu0 0.0
        %690 = vmatpush1.msra.mxu0 0.0
        %691 = vmatprep.subr.mxu0 0.0
        %692 = vmatpush1.msra.mxu0 0.0
        %693 = vmatprep.subr.mxu0 0.0
        %694 = vmatpush1.msra.mxu0 0.0
        %695 = vmatprep.subr.mxu0 0.0
        %696 = vmatpush1.msra.mxu0 0.0
        %697 = vmatprep.subr.mxu0 0.0
        %698 = vmatpush1.msra.mxu0 0.0
        %699 = vmatprep.subr.mxu0 0.0
        %700 = vmatpush1.msra.mxu0 0.0
        %701 = vmatprep.subr.mxu0 0.0
        %702 = vmatpush1.msra.mxu0 0.0
        %703 = vmatprep.subr.mxu0 0.0
        %704 = vmatpush1.msra.mxu0 0.0
        %705 = vmatprep.subr.mxu0 0.0
        %706 = vmatpush1.msra.mxu0 0.0
        %707 = vmatprep.subr.mxu0 0.0
        %708 = vmatpush1.msra.mxu0 0.0
        %709 = vmatprep.subr.mxu0 0.0
        %710 = vmatpush1.msra.mxu0 0.0
        %711 = vmatprep.subr.mxu0 0.0
        %712 = vmatpush1.msra.mxu0 0.0
        %713 = vmatprep.subr.mxu0 0.0
        %714 = vmatpush1.msra.mxu0 0.0
        %715 = vmatprep.subr.mxu0 0.0
        %716 = vmatpush1.msra.mxu0 0.0
        %717 = vmatprep.subr.mxu0 0.0
        %718 = vmatpush1.msra.mxu0 0.0
        %719 = vmatprep.subr.mxu0 0.0
        %720 = vmatpush1.msra.mxu0 0.0
        %721 = vmatprep.subr.mxu0 0.0
        %722 = vmatpush1.msra.mxu0 0.0
        %723 = vmatprep.subr.mxu0 0.0
        %724 = vmatpush1.msra.mxu0 0.0
        %725 = vmatprep.subr.mxu0 0.0
        %726 = vmatpush1.msra.mxu0 0.0
        %727 = vmatprep.subr.mxu0 0.0
        %728 = vmatpush1.msra.mxu0 0.0
        %729 = vmatprep.subr.mxu0 0.0
        %730 = vmatpush1.msra.mxu0 0.0
        %731 = vmatprep.subr.mxu0 0.0
        %732 = vmatpush1.msra.mxu0 0.0
        %733 = vmatprep.subr.mxu0 0.0
        %734 = vmatpush1.msra.mxu0 0.0
        %735 = vmatprep.subr.mxu0 0.0
        %736 = vmatpush1.msra.mxu0 0.0
        %737 = vmatprep.subr.mxu0 0.0
        %738 = vmatpush1.msra.mxu0 0.0
        %739 = vmatprep.subr.mxu0 0.0
        %740 = vmatpush1.msra.mxu0 0.0
        %741 = vmatprep.subr.mxu0 0.0
        %742 = vmatpush1.msra.mxu0 0.0
        %743 = vmatprep.subr.mxu0 0.0
        %744 = vmatpush1.msra.mxu0 0.0
        %745 = vmatprep.subr.mxu0 0.0
        %746 = vmatpush1.msra.mxu0 0.0
        %747 = vmatprep.subr.mxu0 0.0
        %748 = vmatpush1.msra.mxu0 0.0
        %749 = vmatprep.mubr.f32.mxu0 0.0
        %v750 = vand.u32 %v334, 4294901760
        %751 = vmatmul.mubr.f32.gmra.mrb[0].mxu0 %v750
        %v752 = vpop.f32.mrb[0].mxu0
        %v753 = vadd.f32 %v668, %v752
        %v754 = vpop.f32.mrb[0].mxu0
        %755 = vmatprep.mubr.f32.mxu0 0.0
        %v756 = vand.u32 %v337, 4294901760
        %757 = vmatmul.mubr.f32.gmra.mrb[0].mxu0 %v756
        %v758 = vpop.f32.mrb[0].mxu0
        %v759 = vadd.f32 %v676, %v758
        %v760 = vpop.f32.mrb[0].mxu0
        %761 = vdwg.mxu0
        %762 = vmatprep.subr.mxu0 0.0
        %v763 = vand.u32 %v316, 4294901760
        %764 = vmatpush1.msra.mxu0 %v763
        %765 = vmatprep.subr.mxu0 0.0
        %v766 = vand.u32 %v317, 4294901760
        %767 = vmatpush1.msra.mxu0 %v766
        %768 = vmatprep.subr.mxu0 0.0
        %769 = vmatpush1.msra.mxu0 0.0
        %770 = vmatprep.subr.mxu0 0.0
        %771 = vmatpush1.msra.mxu0 0.0
        %772 = vmatprep.subr.mxu0 0.0
        %773 = vmatpush1.msra.mxu0 0.0
        %774 = vmatprep.subr.mxu0 0.0
        %775 = vmatpush1.msra.mxu0 0.0
        %776 = vmatprep.subr.mxu0 0.0
        %777 = vmatpush1.msra.mxu0 0.0
        %778 = vmatprep.subr.mxu0 0.0
        %779 = vmatpush1.msra.mxu0 0.0
        %780 = vmatprep.subr.mxu0 0.0
        %781 = vmatpush1.msra.mxu0 0.0
        %782 = vmatprep.subr.mxu0 0.0
        %783 = vmatpush1.msra.mxu0 0.0
        %784 = vmatprep.subr.mxu0 0.0
        %785 = vmatpush1.msra.mxu0 0.0
        %786 = vmatprep.subr.mxu0 0.0
        %787 = vmatpush1.msra.mxu0 0.0
        %788 = vmatprep.subr.mxu0 0.0
        %789 = vmatpush1.msra.mxu0 0.0
        %790 = vmatprep.subr.mxu0 0.0
        %791 = vmatpush1.msra.mxu0 0.0
        %792 = vmatprep.subr.mxu0 0.0
        %793 = vmatpush1.msra.mxu0 0.0
        %794 = vmatprep.subr.mxu0 0.0
        %795 = vmatpush1.msra.mxu0 0.0
        %796 = vmatprep.subr.mxu0 0.0
        %797 = vmatpush1.msra.mxu0 0.0
        %798 = vmatprep.subr.mxu0 0.0
        %799 = vmatpush1.msra.mxu0 0.0
        %800 = vmatprep.subr.mxu0 0.0
        %801 = vmatpush1.msra.mxu0 0.0
        %802 = vmatprep.subr.mxu0 0.0
        %803 = vmatpush1.msra.mxu0 0.0
        %804 = vmatprep.subr.mxu0 0.0
        %805 = vmatpush1.msra.mxu0 0.0
        %806 = vmatprep.subr.mxu0 0.0
        %807 = vmatpush1.msra.mxu0 0.0
        %808 = vmatprep.subr.mxu0 0.0
        %809 = vmatpush1.msra.mxu0 0.0
        %810 = vmatprep.subr.mxu0 0.0
        %811 = vmatpush1.msra.mxu0 0.0
        %812 = vmatprep.subr.mxu0 0.0
        %813 = vmatpush1.msra.mxu0 0.0
        %814 = vmatprep.subr.mxu0 0.0
        %815 = vmatpush1.msra.mxu0 0.0
        %816 = vmatprep.subr.mxu0 0.0
        %817 = vmatpush1.msra.mxu0 0.0
        %818 = vmatprep.subr.mxu0 0.0
        %819 = vmatpush1.msra.mxu0 0.0
        %820 = vmatprep.subr.mxu0 0.0
        %821 = vmatpush1.msra.mxu0 0.0
        %822 = vmatprep.subr.mxu0 0.0
        %823 = vmatpush1.msra.mxu0 0.0
        %824 = vmatprep.subr.mxu0 0.0
        %825 = vmatpush1.msra.mxu0 0.0
        %826 = vmatprep.subr.mxu0 0.0
        %827 = vmatpush1.msra.mxu0 0.0
        %828 = vmatprep.mubr.f32.mxu0 0.0
        %v829 = vand.u32 %v334, 4294901760
        %830 = vmatmul.mubr.f32.gmra.mrb[0].mxu0 %v829
        %v831 = vpop.f32.mrb[0].mxu0
        %v832 = vadd.f32 %v753, %v831
        %v833 = vpop.f32.mrb[0].mxu0
        %834 = vmatprep.mubr.f32.mxu0 0.0
        %v835 = vand.u32 %v337, 4294901760
        %836 = vmatmul.mubr.f32.gmra.mrb[0].mxu0 %v835
        %v837 = vpop.f32.mrb[0].mxu0
        %v838 = vadd.f32 %v759, %v837
        %v839 = vpop.f32.mrb[0].mxu0
        %840 = vdwg.mxu0
        %v841 = vmax.f32 %v832, 0.0
        %v842 = vmax.f32 %v838, 0.0
        %v843 = vld [vmem:[%s4] sm:$0xff]
        %v844 = vld [vmem:[%s5] sm:$0xff]
        %846 = vset.pattern.permute.xlu0 0
        %847 = vperm.xlu0 %846, %v844
        %v848 = vpop.permute.xlu0 %847
        %v851 = vsel %vm332, %v843, 0
        %853 = vmatprep.subr.mxu0 0.0
        %v854 = vand.u32 %v841, 4294901760
        %855 = vmatpush1.msra.mxu0 %v854
        %856 = vmatprep.subr.mxu0 0.0
        %v857 = vand.u32 %v842, 4294901760
        %858 = vmatpush1.msra.mxu0 %v857
        %859 = vmatprep.subr.mxu0 0.0
        %860 = vmatpush1.msra.mxu0 0.0
        %861 = vmatprep.subr.mxu0 0.0
        %862 = vmatpush1.msra.mxu0 0.0
        %863 = vmatprep.subr.mxu0 0.0
        %864 = vmatpush1.msra.mxu0 0.0
        %865 = vmatprep.subr.mxu0 0.0
        %866 = vmatpush1.msra.mxu0 0.0
        %867 = vmatprep.subr.mxu0 0.0
        %868 = vmatpush1.msra.mxu0 0.0
        %869 = vmatprep.subr.mxu0 0.0
        %870 = vmatpush1.msra.mxu0 0.0
        %871 = vmatprep.subr.mxu0 0.0
        %872 = vmatpush1.msra.mxu0 0.0
        %873 = vmatprep.subr.mxu0 0.0
        %874 = vmatpush1.msra.mxu0 0.0
        %875 = vmatprep.subr.mxu0 0.0
        %876 = vmatpush1.msra.mxu0 0.0
        %877 = vmatprep.subr.mxu0 0.0
        %878 = vmatpush1.msra.mxu0 0.0
        %879 = vmatprep.subr.mxu0 0.0
        %880 = vmatpush1.msra.mxu0 0.0
        %881 = vmatprep.subr.mxu0 0.0
        %882 = vmatpush1.msra.mxu0 0.0
        %883 = vmatprep.subr.mxu0 0.0
        %884 = vmatpush1.msra.mxu0 0.0
        %885 = vmatprep.subr.mxu0 0.0
        %886 = vmatpush1.msra.mxu0 0.0
        %887 = vmatprep.subr.mxu0 0.0
        %888 = vmatpush1.msra.mxu0 0.0
        %889 = vmatprep.subr.mxu0 0.0
        %890 = vmatpush1.msra.mxu0 0.0
        %891 = vmatprep.subr.mxu0 0.0
        %892 = vmatpush1.msra.mxu0 0.0
        %893 = vmatprep.subr.mxu0 0.0
        %894 = vmatpush1.msra.mxu0 0.0
        %895 = vmatprep.subr.mxu0 0.0
        %896 = vmatpush1.msra.mxu0 0.0
        %897 = vmatprep.subr.mxu0 0.0
        %898 = vmatpush1.msra.mxu0 0.0
        %899 = vmatprep.subr.mxu0 0.0
        %900 = vmatpush1.msra.mxu0 0.0
        %901 = vmatprep.subr.mxu0 0.0
        %902 = vmatpush1.msra.mxu0 0.0
        %903 = vmatprep.subr.mxu0 0.0
        %904 = vmatpush1.msra.mxu0 0.0
        %905 = vmatprep.subr.mxu0 0.0
        %906 = vmatpush1.msra.mxu0 0.0
        %907 = vmatprep.subr.mxu0 0.0
        %908 = vmatpush1.msra.mxu0 0.0
        %909 = vmatprep.subr.mxu0 0.0
        %910 = vmatpush1.msra.mxu0 0.0
        %911 = vmatprep.subr.mxu0 0.0
        %912 = vmatpush1.msra.mxu0 0.0
        %913 = vmatprep.subr.mxu0 0.0
        %914 = vmatpush1.msra.mxu0 0.0
        %915 = vmatprep.subr.mxu0 0.0
        %916 = vmatpush1.msra.mxu0 0.0
        %917 = vmatprep.subr.mxu0 0.0
        %918 = vmatpush1.msra.mxu0 0.0
        %919 = vmatprep.mubr.f32.mxu0 0.0
        %v920 = vand.u32 %v851, 4294901760
        %v921 = vsub.f32 %v851, %v920
        %v922 = vand.u32 %v921, 4294901760
        %v923 = vsub.f32 %v921, %v922
        %v924 = vand.u32 %v923, 4294901760
        %925 = vmatmul.mubr.f32.gmra.mrb[0].mxu0 %v924
        %v926 = vpop.f32.mrb[0].mxu0
        %v927 = vadd.f32 %v848, %v926
        %v928 = vpop.f32.mrb[0].mxu0
        %929 = vdwg.mxu0
        %930 = vmatprep.subr.mxu0 0.0
        %v931 = vand.u32 %v841, 4294901760
        %v932 = vsub.f32 %v841, %v931
        %v933 = vand.u32 %v932, 4294901760
        %v934 = vsub.f32 %v932, %v933
        %v935 = vand.u32 %v934, 4294901760
        %936 = vmatpush1.msra.mxu0 %v935
        %937 = vmatprep.subr.mxu0 0.0
        %v938 = vand.u32 %v842, 4294901760
        %v939 = vsub.f32 %v842, %v938
        %v940 = vand.u32 %v939, 4294901760
        %v941 = vsub.f32 %v939, %v940
        %v942 = vand.u32 %v941, 4294901760
        %943 = vmatpush1.msra.mxu0 %v942
        %944 = vmatprep.subr.mxu0 0.0
        %945 = vmatpush1.msra.mxu0 0.0
        %946 = vmatprep.subr.mxu0 0.0
        %947 = vmatpush1.msra.mxu0 0.0
        %948 = vmatprep.subr.mxu0 0.0
        %949 = vmatpush1.msra.mxu0 0.0
        %950 = vmatprep.subr.mxu0 0.0
        %951 = vmatpush1.msra.mxu0 0.0
        %952 = vmatprep.subr.mxu0 0.0
        %953 = vmatpush1.msra.mxu0 0.0
        %954 = vmatprep.subr.mxu0 0.0
        %955 = vmatpush1.msra.mxu0 0.0
        %956 = vmatprep.subr.mxu0 0.0
        %957 = vmatpush1.msra.mxu0 0.0
        %958 = vmatprep.subr.mxu0 0.0
        %959 = vmatpush1.msra.mxu0 0.0
        %960 = vmatprep.subr.mxu0 0.0
        %961 = vmatpush1.msra.mxu0 0.0
        %962 = vmatprep.subr.mxu0 0.0
        %963 = vmatpush1.msra.mxu0 0.0
        %964 = vmatprep.subr.mxu0 0.0
        %965 = vmatpush1.msra.mxu0 0.0
        %966 = vmatprep.subr.mxu0 0.0
        %967 = vmatpush1.msra.mxu0 0.0
        %968 = vmatprep.subr.mxu0 0.0
        %969 = vmatpush1.msra.mxu0 0.0
        %970 = vmatprep.subr.mxu0 0.0
        %971 = vmatpush1.msra.mxu0 0.0
        %972 = vmatprep.subr.mxu0 0.0
        %973 = vmatpush1.msra.mxu0 0.0
        %974 = vmatprep.subr.mxu0 0.0
        %975 = vmatpush1.msra.mxu0 0.0
        %976 = vmatprep.subr.mxu0 0.0
        %977 = vmatpush1.msra.mxu0 0.0
        %978 = vmatprep.subr.mxu0 0.0
        %979 = vmatpush1.msra.mxu0 0.0
        %980 = vmatprep.subr.mxu0 0.0
        %981 = vmatpush1.msra.mxu0 0.0
        %982 = vmatprep.subr.mxu0 0.0
        %983 = vmatpush1.msra.mxu0 0.0
        %984 = vmatprep.subr.mxu0 0.0
        %985 = vmatpush1.msra.mxu0 0.0
        %986 = vmatprep.subr.mxu0 0.0
        %987 = vmatpush1.msra.mxu0 0.0
        %988 = vmatprep.subr.mxu0 0.0
        %989 = vmatpush1.msra.mxu0 0.0
        %990 = vmatprep.subr.mxu0 0.0
        %991 = vmatpush1.msra.mxu0 0.0
        %992 = vmatprep.subr.mxu0 0.0
        %993 = vmatpush1.msra.mxu0 0.0
        %994 = vmatprep.subr.mxu0 0.0
        %995 = vmatpush1.msra.mxu0 0.0
        %996 = vmatprep.subr.mxu0 0.0
        %997 = vmatpush1.msra.mxu0 0.0
        %998 = vmatprep.subr.mxu0 0.0
        %999 = vmatpush1.msra.mxu0 0.0
        %1000 = vmatprep.subr.mxu0 0.0
        %1001 = vmatpush1.msra.mxu0 0.0
        %1002 = vmatprep.subr.mxu0 0.0
        %1003 = vmatpush1.msra.mxu0 0.0
        %1004 = vmatprep.mubr.f32.mxu0 0.0
        %v1005 = vand.u32 %v851, 4294901760
        %1006 = vmatmul.mubr.f32.gmra.mrb[0].mxu0 %v1005
        %v1007 = vpop.f32.mrb[0].mxu0
        %v1008 = vadd.f32 %v927, %v1007
        %v1009 = vpop.f32.mrb[0].mxu0
        %1010 = vdwg.mxu0
        %1011 = vmatprep.subr.mxu0 0.0
        %v1012 = vand.u32 %v841, 4294901760
        %v1013 = vsub.f32 %v841, %v1012
        %1014 = vmatpush1.msra.mxu0 %v1013
        %1015 = vmatprep.subr.mxu0 0.0
        %v1016 = vand.u32 %v842, 4294901760
        %v1017 = vsub.f32 %v842, %v1016
        %1018 = vmatpush1.msra.mxu0 %v1017
        %1019 = vmatprep.subr.mxu0 0.0
        %1020 = vmatpush1.msra.mxu0 0.0
        %1021 = vmatprep.subr.mxu0 0.0
        %1022 = vmatpush1.msra.mxu0 0.0
        %1023 = vmatprep.subr.mxu0 0.0
        %1024 = vmatpush1.msra.mxu0 0.0
        %1025 = vmatprep.subr.mxu0 0.0
        %1026 = vmatpush1.msra.mxu0 0.0
        %1027 = vmatprep.subr.mxu0 0.0
        %1028 = vmatpush1.msra.mxu0 0.0
        %1029 = vmatprep.subr.mxu0 0.0
        %1030 = vmatpush1.msra.mxu0 0.0
        %1031 = vmatprep.subr.mxu0 0.0
        %1032 = vmatpush1.msra.mxu0 0.0
        %1033 = vmatprep.subr.mxu0 0.0
        %1034 = vmatpush1.msra.mxu0 0.0
        %1035 = vmatprep.subr.mxu0 0.0
        %1036 = vmatpush1.msra.mxu0 0.0
        %1037 = vmatprep.subr.mxu0 0.0
        %1038 = vmatpush1.msra.mxu0 0.0
        %1039 = vmatprep.subr.mxu0 0.0
        %1040 = vmatpush1.msra.mxu0 0.0
        %1041 = vmatprep.subr.mxu0 0.0
        %1042 = vmatpush1.msra.mxu0 0.0
        %1043 = vmatprep.subr.mxu0 0.0
        %1044 = vmatpush1.msra.mxu0 0.0
        %1045 = vmatprep.subr.mxu0 0.0
        %1046 = vmatpush1.msra.mxu0 0.0
        %1047 = vmatprep.subr.mxu0 0.0
        %1048 = vmatpush1.msra.mxu0 0.0
        %1049 = vmatprep.subr.mxu0 0.0
        %1050 = vmatpush1.msra.mxu0 0.0
        %1051 = vmatprep.subr.mxu0 0.0
        %1052 = vmatpush1.msra.mxu0 0.0
        %1053 = vmatprep.subr.mxu0 0.0
        %1054 = vmatpush1.msra.mxu0 0.0
        %1055 = vmatprep.subr.mxu0 0.0
        %1056 = vmatpush1.msra.mxu0 0.0
        %1057 = vmatprep.subr.mxu0 0.0
        %1058 = vmatpush1.msra.mxu0 0.0
        %1059 = vmatprep.subr.mxu0 0.0
        %1060 = vmatpush1.msra.mxu0 0.0
        %1061 = vmatprep.subr.mxu0 0.0
        %1062 = vmatpush1.msra.mxu0 0.0
        %1063 = vmatprep.subr.mxu0 0.0
        %1064 = vmatpush1.msra.mxu0 0.0
        %1065 = vmatprep.subr.mxu0 0.0
        %1066 = vmatpush1.msra.mxu0 0.0
        %1067 = vmatprep.subr.mxu0 0.0
        %1068 = vmatpush1.msra.mxu0 0.0
        %1069 = vmatprep.subr.mxu0 0.0
        %1070 = vmatpush1.msra.mxu0 0.0
        %1071 = vmatprep.subr.mxu0 0.0
        %1072 = vmatpush1.msra.mxu0 0.0
        %1073 = vmatprep.subr.mxu0 0.0
        %1074 = vmatpush1.msra.mxu0 0.0
        %1075 = vmatprep.subr.mxu0 0.0
        %1076 = vmatpush1.msra.mxu0 0.0
        %1077 = vmatprep.subr.mxu0 0.0
        %1078 = vmatpush1.msra.mxu0 0.0
        %1079 = vmatprep.mubr.f32.mxu0 0.0
        %v1080 = vand.u32 %v851, 4294901760
        %v1081 = vsub.f32 %v851, %v1080
        %1082 = vmatmul.mubr.f32.gmra.mrb[0].mxu0 %v1081
        %v1083 = vpop.f32.mrb[0].mxu0
        %v1084 = vadd.f32 %v1008, %v1083
        %v1085 = vpop.f32.mrb[0].mxu0
        %1086 = vdwg.mxu0
        %1087 = vmatprep.subr.mxu0 0.0
        %v1088 = vand.u32 %v841, 4294901760
        %1089 = vmatpush1.msra.mxu0 %v1088
        %1090 = vmatprep.subr.mxu0 0.0
        %v1091 = vand.u32 %v842, 4294901760
        %1092 = vmatpush1.msra.mxu0 %v1091
        %1093 = vmatprep.subr.mxu0 0.0
        %1094 = vmatpush1.msra.mxu0 0.0
        %1095 = vmatprep.subr.mxu0 0.0
        %1096 = vmatpush1.msra.mxu0 0.0
        %1097 = vmatprep.subr.mxu0 0.0
        %1098 = vmatpush1.msra.mxu0 0.0
        %1099 = vmatprep.subr.mxu0 0.0
        %1100 = vmatpush1.msra.mxu0 0.0
        %1101 = vmatprep.subr.mxu0 0.0
        %1102 = vmatpush1.msra.mxu0 0.0
        %1103 = vmatprep.subr.mxu0 0.0
        %1104 = vmatpush1.msra.mxu0 0.0
        %1105 = vmatprep.subr.mxu0 0.0
        %1106 = vmatpush1.msra.mxu0 0.0
        %1107 = vmatprep.subr.mxu0 0.0
        %1108 = vmatpush1.msra.mxu0 0.0
        %1109 = vmatprep.subr.mxu0 0.0
        %1110 = vmatpush1.msra.mxu0 0.0
        %1111 = vmatprep.subr.mxu0 0.0
        %1112 = vmatpush1.msra.mxu0 0.0
        %1113 = vmatprep.subr.mxu0 0.0
        %1114 = vmatpush1.msra.mxu0 0.0
        %1115 = vmatprep.subr.mxu0 0.0
        %1116 = vmatpush1.msra.mxu0 0.0
        %1117 = vmatprep.subr.mxu0 0.0
        %1118 = vmatpush1.msra.mxu0 0.0
        %1119 = vmatprep.subr.mxu0 0.0
        %1120 = vmatpush1.msra.mxu0 0.0
        %1121 = vmatprep.subr.mxu0 0.0
        %1122 = vmatpush1.msra.mxu0 0.0
        %1123 = vmatprep.subr.mxu0 0.0
        %1124 = vmatpush1.msra.mxu0 0.0
        %1125 = vmatprep.subr.mxu0 0.0
        %1126 = vmatpush1.msra.mxu0 0.0
        %1127 = vmatprep.subr.mxu0 0.0
        %1128 = vmatpush1.msra.mxu0 0.0
        %1129 = vmatprep.subr.mxu0 0.0
        %1130 = vmatpush1.msra.mxu0 0.0
        %1131 = vmatprep.subr.mxu0 0.0
        %1132 = vmatpush1.msra.mxu0 0.0
        %1133 = vmatprep.subr.mxu0 0.0
        %1134 = vmatpush1.msra.mxu0 0.0
        %1135 = vmatprep.subr.mxu0 0.0
        %1136 = vmatpush1.msra.mxu0 0.0
        %1137 = vmatprep.subr.mxu0 0.0
        %1138 = vmatpush1.msra.mxu0 0.0
        %1139 = vmatprep.subr.mxu0 0.0
        %1140 = vmatpush1.msra.mxu0 0.0
        %1141 = vmatprep.subr.mxu0 0.0
        %1142 = vmatpush1.msra.mxu0 0.0
        %1143 = vmatprep.subr.mxu0 0.0
        %1144 = vmatpush1.msra.mxu0 0.0
        %1145 = vmatprep.subr.mxu0 0.0
        %1146 = vmatpush1.msra.mxu0 0.0
        %1147 = vmatprep.subr.mxu0 0.0
        %1148 = vmatpush1.msra.mxu0 0.0
        %1149 = vmatprep.subr.mxu0 0.0
        %1150 = vmatpush1.msra.mxu0 0.0
        %1151 = vmatprep.subr.mxu0 0.0
        %1152 = vmatpush1.msra.mxu0 0.0
        %1153 = vmatprep.mubr.f32.mxu0 0.0
        %v1154 = vand.u32 %v851, 4294901760
        %v1155 = vsub.f32 %v851, %v1154
        %v1156 = vand.u32 %v1155, 4294901760
        %1157 = vmatmul.mubr.f32.gmra.mrb[0].mxu0 %v1156
        %v1158 = vpop.f32.mrb[0].mxu0
        %v1159 = vadd.f32 %v1084, %v1158
        %v1160 = vpop.f32.mrb[0].mxu0
        %1161 = vdwg.mxu0
        %1162 = vmatprep.subr.mxu0 0.0
        %v1163 = vand.u32 %v841, 4294901760
        %v1164 = vsub.f32 %v841, %v1163
        %v1165 = vand.u32 %v1164, 4294901760
        %1166 = vmatpush1.msra.mxu0 %v1165
        %1167 = vmatprep.subr.mxu0 0.0
        %v1168 = vand.u32 %v842, 4294901760
        %v1169 = vsub.f32 %v842, %v1168
        %v1170 = vand.u32 %v1169, 4294901760
        %1171 = vmatpush1.msra.mxu0 %v1170
        %1172 = vmatprep.subr.mxu0 0.0
        %1173 = vmatpush1.msra.mxu0 0.0
        %1174 = vmatprep.subr.mxu0 0.0
        %1175 = vmatpush1.msra.mxu0 0.0
        %1176 = vmatprep.subr.mxu0 0.0
        %1177 = vmatpush1.msra.mxu0 0.0
        %1178 = vmatprep.subr.mxu0 0.0
        %1179 = vmatpush1.msra.mxu0 0.0
        %1180 = vmatprep.subr.mxu0 0.0
        %1181 = vmatpush1.msra.mxu0 0.0
        %1182 = vmatprep.subr.mxu0 0.0
        %1183 = vmatpush1.msra.mxu0 0.0
        %1184 = vmatprep.subr.mxu0 0.0
        %1185 = vmatpush1.msra.mxu0 0.0
        %1186 = vmatprep.subr.mxu0 0.0
        %1187 = vmatpush1.msra.mxu0 0.0
        %1188 = vmatprep.subr.mxu0 0.0
        %1189 = vmatpush1.msra.mxu0 0.0
        %1190 = vmatprep.subr.mxu0 0.0
        %1191 = vmatpush1.msra.mxu0 0.0
        %1192 = vmatprep.subr.mxu0 0.0
        %1193 = vmatpush1.msra.mxu0 0.0
        %1194 = vmatprep.subr.mxu0 0.0
        %1195 = vmatpush1.msra.mxu0 0.0
        %1196 = vmatprep.subr.mxu0 0.0
        %1197 = vmatpush1.msra.mxu0 0.0
        %1198 = vmatprep.subr.mxu0 0.0
        %1199 = vmatpush1.msra.mxu0 0.0
        %1200 = vmatprep.subr.mxu0 0.0
        %1201 = vmatpush1.msra.mxu0 0.0
        %1202 = vmatprep.subr.mxu0 0.0
        %1203 = vmatpush1.msra.mxu0 0.0
        %1204 = vmatprep.subr.mxu0 0.0
        %1205 = vmatpush1.msra.mxu0 0.0
        %1206 = vmatprep.subr.mxu0 0.0
        %1207 = vmatpush1.msra.mxu0 0.0
        %1208 = vmatprep.subr.mxu0 0.0
        %1209 = vmatpush1.msra.mxu0 0.0
        %1210 = vmatprep.subr.mxu0 0.0
        %1211 = vmatpush1.msra.mxu0 0.0
        %1212 = vmatprep.subr.mxu0 0.0
        %1213 = vmatpush1.msra.mxu0 0.0
        %1214 = vmatprep.subr.mxu0 0.0
        %1215 = vmatpush1.msra.mxu0 0.0
        %1216 = vmatprep.subr.mxu0 0.0
        %1217 = vmatpush1.msra.mxu0 0.0
        %1218 = vmatprep.subr.mxu0 0.0
        %1219 = vmatpush1.msra.mxu0 0.0
        %1220 = vmatprep.subr.mxu0 0.0
        %1221 = vmatpush1.msra.mxu0 0.0
        %1222 = vmatprep.subr.mxu0 0.0
        %1223 = vmatpush1.msra.mxu0 0.0
        %1224 = vmatprep.subr.mxu0 0.0
        %1225 = vmatpush1.msra.mxu0 0.0
        %1226 = vmatprep.subr.mxu0 0.0
        %1227 = vmatpush1.msra.mxu0 0.0
        %1228 = vmatprep.subr.mxu0 0.0
        %1229 = vmatpush1.msra.mxu0 0.0
        %1230 = vmatprep.subr.mxu0 0.0
        %1231 = vmatpush1.msra.mxu0 0.0
        %1232 = vmatprep.mubr.f32.mxu0 0.0
        %v1233 = vand.u32 %v851, 4294901760
        %1234 = vmatmul.mubr.f32.gmra.mrb[0].mxu0 %v1233
        %v1235 = vpop.f32.mrb[0].mxu0
        %v1236 = vadd.f32 %v1159, %v1235
        %v1237 = vpop.f32.mrb[0].mxu0
        %1238 = vdwg.mxu0
        %1239 = vmatprep.subr.mxu0 0.0
        %v1240 = vand.u32 %v841, 4294901760
        %1241 = vmatpush1.msra.mxu0 %v1240
        %1242 = vmatprep.subr.mxu0 0.0
        %v1243 = vand.u32 %v842, 4294901760
        %1244 = vmatpush1.msra.mxu0 %v1243
        %1245 = vmatprep.subr.mxu0 0.0
        %1246 = vmatpush1.msra.mxu0 0.0
        %1247 = vmatprep.subr.mxu0 0.0
        %1248 = vmatpush1.msra.mxu0 0.0
        %1249 = vmatprep.subr.mxu0 0.0
        %1250 = vmatpush1.msra.mxu0 0.0
        %1251 = vmatprep.subr.mxu0 0.0
        %1252 = vmatpush1.msra.mxu0 0.0
        %1253 = vmatprep.subr.mxu0 0.0
        %1254 = vmatpush1.msra.mxu0 0.0
        %1255 = vmatprep.subr.mxu0 0.0
        %1256 = vmatpush1.msra.mxu0 0.0
        %1257 = vmatprep.subr.mxu0 0.0
        %1258 = vmatpush1.msra.mxu0 0.0
        %1259 = vmatprep.subr.mxu0 0.0
        %1260 = vmatpush1.msra.mxu0 0.0
        %1261 = vmatprep.subr.mxu0 0.0
        %1262 = vmatpush1.msra.mxu0 0.0
        %1263 = vmatprep.subr.mxu0 0.0
        %1264 = vmatpush1.msra.mxu0 0.0
        %1265 = vmatprep.subr.mxu0 0.0
        %1266 = vmatpush1.msra.mxu0 0.0
        %1267 = vmatprep.subr.mxu0 0.0
        %1268 = vmatpush1.msra.mxu0 0.0
        %1269 = vmatprep.subr.mxu0 0.0
        %1270 = vmatpush1.msra.mxu0 0.0
        %1271 = vmatprep.subr.mxu0 0.0
        %1272 = vmatpush1.msra.mxu0 0.0
        %1273 = vmatprep.subr.mxu0 0.0
        %1274 = vmatpush1.msra.mxu0 0.0
        %1275 = vmatprep.subr.mxu0 0.0
        %1276 = vmatpush1.msra.mxu0 0.0
        %1277 = vmatprep.subr.mxu0 0.0
        %1278 = vmatpush1.msra.mxu0 0.0
        %1279 = vmatprep.subr.mxu0 0.0
        %1280 = vmatpush1.msra.mxu0 0.0
        %1281 = vmatprep.subr.mxu0 0.0
        %1282 = vmatpush1.msra.mxu0 0.0
        %1283 = vmatprep.subr.mxu0 0.0
        %1284 = vmatpush1.msra.mxu0 0.0
        %1285 = vmatprep.subr.mxu0 0.0
        %1286 = vmatpush1.msra.mxu0 0.0
        %1287 = vmatprep.subr.mxu0 0.0
        %1288 = vmatpush1.msra.mxu0 0.0
        %1289 = vmatprep.subr.mxu0 0.0
        %1290 = vmatpush1.msra.mxu0 0.0
        %1291 = vmatprep.subr.mxu0 0.0
        %1292 = vmatpush1.msra.mxu0 0.0
        %1293 = vmatprep.subr.mxu0 0.0
        %1294 = vmatpush1.msra.mxu0 0.0
        %1295 = vmatprep.subr.mxu0 0.0
        %1296 = vmatpush1.msra.mxu0 0.0
        %1297 = vmatprep.subr.mxu0 0.0
        %1298 = vmatpush1.msra.mxu0 0.0
        %1299 = vmatprep.subr.mxu0 0.0
        %1300 = vmatpush1.msra.mxu0 0.0
        %1301 = vmatprep.subr.mxu0 0.0
        %1302 = vmatpush1.msra.mxu0 0.0
        %1303 = vmatprep.subr.mxu0 0.0
        %1304 = vmatpush1.msra.mxu0 0.0
        %1305 = vmatprep.mubr.f32.mxu0 0.0
        %v1306 = vand.u32 %v851, 4294901760
        %1307 = vmatmul.mubr.f32.gmra.mrb[0].mxu0 %v1306
        %v1308 = vpop.f32.mrb[0].mxu0
        %v1309 = vadd.f32 %v1236, %v1308
        %v1310 = vpop.f32.mrb[0].mxu0
        %1311 = vdwg.mxu0
        %v1312 = vxor.u32 %v1309, 2147483648
        %v1313 = vmul.f32 %v1312, 1.442695
        %v1314 = vpow.pop %v1313
        %v1315 = vadd.f32 %v1314, 1.0
        %v1316 = vrcp.pop %v1315
        %v1317 = vmul.f32 1.0, %v1316
        %v1318 = vmul.f32 %v317, %v1317
        %1319 = vst [vmem:[%s307] sm:$0xff] %v1318
        %s1320 = sand.u32 %s185, 1
        %s1321 = scalar_lea.sflag [#allocation4], %s1320
        %s1322 = sand.u32 %s185, 1
        %s1323 = smul.addr %s1322, 8
        %s1324 = scalar_lea.vmem [#allocation5], %s1323
        // Predicated region
        $region49: #{tpu_custom_call.1} parent=43 // pred_check
          %p1325 = pneg %p195
        $region50: #{tpu_custom_call.1} parent=43 // pred_check_branch
          %1327 = sbr.rel (%p1325) target = $region52
        $region51: #{tpu_custom_call.1} parent=43 // pred_region
          %s1329 = ssub.s32 128, 128
          %1330 = vsyncadd %s1321, %s1329
          %s1331 = smul.addr %s27, 2
          %s1332 = sadd.s32 %s28, %s1331
          %s1333 = smul.addr %s1332, 128
          %s1334 = scalar_lea.hbm %s6, %s1333
          %s1336 = sshll.u32 %s1324, 4
          %s1337 = int_to_ptr.vmem [resolvable:$true] %s1336
          %1339 = dma.vmem_to_hbm [thread:$0]  %s1337, 128, %s1334, %s1321
        $region52: #{tpu_custom_call.1} parent=43 // pred_fallthru
          _
      $region44: #{tpu_custom_call.1} parent=5 // pred_fallthru
        _
      %p1340 = scmp.le.s32.totalorder 2, %s18
      // Predicated region
      $region53: #{tpu_custom_call.1} parent=5 // pred_check
        %p1341 = pneg %p1340
      $region54: #{tpu_custom_call.1} parent=5 // pred_check_branch
        %1343 = sbr.rel (%p1341) target = $region56
      $region55: #{tpu_custom_call.1} parent=5 // pred_region
        %s1344 = ssub.s32 %s18, 2
        // Predicated region
        $region57: #{tpu_custom_call.1} parent=55 // pred_check
          %p1345 = pneg %p201
        $region58: #{tpu_custom_call.1} parent=55 // pred_check_branch
          %1347 = sbr.rel (%p1345) target = $region60
        $region59: #{tpu_custom_call.1} parent=55 // pred_region
          %s1348 = sand.u32 %s186, 1
          %s1349 = scalar_lea.sflag [#allocation4], %s1348
          %s1350 = sand.u32 %s186, 1
          %s1351 = smul.addr %s1350, 8
          %s1352 = scalar_lea.vmem [#allocation5], %s1351
          %1353 = dma.done %s1349, 128
        $region60: #{tpu_custom_call.1} parent=55 // pred_fallthru
          _
      $region56: #{tpu_custom_call.1} parent=5 // pred_fallthru
        _
    $region6: #{tpu_custom_call.1} parent=1 // loop_footer
      %s22 = sadd.s32 1, %s18
    $region7: #{tpu_custom_call.1} parent=1 // loop_footer_branch
      %17 = sbr.rel target = $region3
    $region8: #{tpu_custom_call.1} parent=1 // loop_exit
      _
    %1354 = vsyncpa [#allocation3], 1
    %s1355 = scalar_lea.sflag [#allocation3], 1
    %1356 = vsyncpa %s1355, 1
    %1357 = vsyncpa [#allocation4], 1
    %s1358 = scalar_lea.sflag [#allocation4], 1
    %1359 = vsyncpa %s1358, 1

</llo_original>
